<compile_context>
chip_gen: v7x
topology: tpu7x:2x2x1
jax: 0.10.0
libtpu: 0.0.40
codegen_flags: <defaults>
</compile_context>

<pallas_src>
import functools
import math

import jax
import jax.numpy as jnp
from jax import lax
from jax.experimental import pallas as pl
from jax.experimental.pallas import tpu as pltpu

_LANE = 128
_SUBLANE = 8
_INV_SQRT2 = 1.0 / math.sqrt(2.0)


def _round_up(x: int, m: int) -> int:
    return ((x + m - 1) // m) * m


def _gelu(y, approximate: bool):
    if approximate:
        # tanh approximation runs on the EUP slot (nearly free next to the MXU).
        return jax.nn.gelu(y, approximate=True)
    # exact erf GELU: matches torch.nn.GELU() default
    return 0.5 * y * (1.0 + lax.erf(y * _INV_SQRT2))


def _fused_mlp_kernel(*refs, num_layers, emit_hidden, approximate_gelu, compute_dtype):
    """Push one (tm, din_pad0) batch tile through every layer without touching HBM.

    refs layout (fixed by in_specs/out_specs order):
      refs[0]                     : x tile,        compute_dtype, (tm, din_pad[0])
      refs[1 : 1+L]               : layer weights, compute_dtype, (din_pad[l], dout_pad[l])
      refs[1+L : 1+2L]            : layer biases,  f32,           (1, dout_pad[l])
      refs[1+2L]                  : final output,  f32,           (tm, dout_pad[-1])
      refs[2+2L] (if emit_hidden) : last hidden,   f32,           (tm, dout_pad[-2])
    """
    x_ref = refs[0]
    w_refs = refs[1:1 + num_layers]
    b_refs = refs[1 + num_layers:1 + 2 * num_layers]
    out_ref = refs[1 + 2 * num_layers]
    hid_ref = refs[2 + 2 * num_layers] if emit_hidden else None

    # Carry the running activation as a value: num_layers is a trace-time constant so the
    # layer loop unrolls, and per-layer padded widths may differ (no square padding).
    h = x_ref[...]
    for l in range(num_layers):
        # bf16 (or f32) MXU matmul with f32 accumulation; bias add + GELU in f32.
        y = jnp.dot(h, w_refs[l][...], preferred_element_type=jnp.float32)
        y = y + b_refs[l][...]
        if l < num_layers - 1:
            y = _gelu(y, approximate_gelu)
            if emit_hidden and l == num_layers - 2:
                hid_ref[...] = y.astype(hid_ref.dtype)
            h = y.astype(compute_dtype)
        else:
            out_ref[...] = y.astype(out_ref.dtype)


def init_flexible_mlp_params(key, layer_sizes, scale=1.0, bias_scale=0.0):
    """Matches FlexibleMLP.reset_parameters(): N(0, (scale/sqrt(fan_in))^2) weights (out,in)
    and N(0, (bias_scale/sqrt(fan_in))^2) biases."""
    params = []
    for i in range(len(layer_sizes) - 1):
        fan_in, fan_out = layer_sizes[i], layer_sizes[i + 1]
        key, kw, kb = jax.random.split(key, 3)
        w = jax.random.normal(kw, (fan_out, fan_in), jnp.float32) * (scale / math.sqrt(fan_in))
        b = jax.random.normal(kb, (fan_out,), jnp.float32) * (bias_scale / math.sqrt(fan_in))
        params.append((w, b))
    return params


def pack_mlp_params(params, layer_sizes, compute_dtype=jnp.bfloat16):
    """Pad each layer to its OWN lane-dense (round_up(in,128), round_up(out,128)) block.

    Weights stored (in, out) (transposed from PyTorch layout) so the kernel does x @ W.
    Zero padding is semantics-preserving: padded lanes stay exactly 0 through Linear+GELU.
    compute_dtype=bf16 (default) gives bf16 MXU inputs with f32 accumulation; biases stay f32.
    """
    ws, bs = [], []
    for l, (w, b) in enumerate(params):
        din, dout = int(layer_sizes[l]), int(layer_sizes[l + 1])
        din_p, dout_p = _round_up(din, _LANE), _round_up(dout, _LANE)
        wp = jnp.zeros((din_p, dout_p), compute_dtype)
        wp = wp.at[:din, :dout].set(jnp.transpose(w).astype(compute_dtype))
        bp = jnp.zeros((1, dout_p), jnp.float32).at[0, :dout].set(b.astype(jnp.float32))
        ws.append(wp)
        bs.append(bp)
    return {"w": tuple(ws), "b": tuple(bs)}


def _hardware_hints():
    """Return (mxu_rows, usable_vmem_ceiling_bytes) with conservative fallbacks."""
    vmem_cap = 64 << 20          # smallest of the listed generations (v7x per-TC)
    mxu_rows = 128               # v5e MXU row width
    try:
        info = pltpu.get_tpu_info()
        vmem_cap = int(getattr(info, "vmem_capacity_bytes", vmem_cap))
    except Exception:
        pass
    try:
        kind = jax.devices()[0].device_kind.lower()
        if ("v6" in kind) or ("v7" in kind):
            mxu_rows = 256       # v6e / v7x have 2x256x256 MXUs
    except Exception:
        pass
    ceiling = max(vmem_cap - (8 << 20), 32 << 20)   # leave compiler headroom
    return mxu_rows, ceiling


def _vmem_bytes(tm, ws, bs, out_pad, hid_pad):
    """Conservative VMEM requirement (assumes the pipeline double-buffers every block)."""
    itemsize = ws[0].dtype.itemsize
    w_bytes = sum(w.shape[0] * w.shape[1] * itemsize for w in ws)
    b_bytes = sum(b.shape[1] * 4 for b in bs)
    x_bytes = tm * ws[0].shape[0] * itemsize
    out_bytes = tm * out_pad * 4
    hid_bytes = tm * hid_pad * 4
    widest = max(max(w.shape[1] for w in ws), ws[0].shape[0])
    live = 2 * tm * widest * 4   # in-flight activation values / spill slack
    return 2 * (w_bytes + b_bytes + x_bytes + out_bytes + hid_bytes) + live


def flexible_mlp_forward(x, packed, *, layer_sizes, return_last_hidden=False,
                         approximate_gelu=False):
    """Forward identical to FlexibleMLP.forward (GELU between layers, identity on the last).

    `layer_sizes` must be a static Python tuple (bind with functools.partial before jax.jit);
    it only drives shapes/tiling, never runtime values.
    """
    ws, bs = packed["w"], packed["b"]
    layer_sizes = tuple(int(s) for s in layer_sizes)
    num_layers = len(ws)
    assert num_layers == len(layer_sizes) - 1 and num_layers >= 1

    compute_dtype = ws[0].dtype
    batch, d_in = x.shape
    d_out = layer_sizes[-1]
    out_pad = ws[-1].shape[1]
    emit_hidden = bool(return_last_hidden) and num_layers >= 2
    d_hid = layer_sizes[-2] if emit_hidden else 0
    hid_pad = ws[-1].shape[0] if emit_hidden else 0   # padded width of the last hidden layer

    mxu_rows, vmem_ceiling = _hardware_hints()

    # Batch tile: sublane-aligned single tile for tiny batches; 128 rows otherwise;
    # 256 rows on v6e/v7x (256-wide MXU) for large batches when it still fits VMEM.
    if batch < _LANE:
        tm = max(_SUBLANE, _round_up(batch, _SUBLANE))
    else:
        tm = _LANE
        if (mxu_rows >= 256 and batch >= 256
                and _vmem_bytes(256, ws, bs, out_pad, hid_pad) <= vmem_ceiling):
            tm = 256
    b_pad = _round_up(batch, tm)

    # Pad only the slack rows/lanes (no full zeros+set re-materialization of x).
    x_c = x.astype(compute_dtype)
    pad_rows, pad_cols = b_pad - batch, ws[0].shape[0] - d_in
    if pad_rows or pad_cols:
        x_c = jnp.pad(x_c, ((0, pad_rows), (0, pad_cols)))

    need = _vmem_bytes(tm, ws, bs, out_pad, hid_pad)
    vmem_limit = int(min(max(need + (4 << 20), 32 << 20), vmem_ceiling))
    # TODO(synk): if the resident per-layer weight set ever exceeds vmem_ceiling, add an
    # "arbitrary" inner grid axis that streams (din, dout) weight blocks per layer; on v7x
    # also consider VMEM_SHARED so both TensorCores share a single weight copy.

    # Input specs: x is tiled over the batch axis; weights/biases have index_maps that are
    # constant in the batch axis -> DMA'd once and kept resident across all batch tiles.
    in_specs = [pl.BlockSpec((tm, ws[0].shape[0]), lambda i: (i, 0))]
    for w in ws:
        in_specs.append(pl.BlockSpec(w.shape, lambda i: (0, 0)))
    for b in bs:
        in_specs.append(pl.BlockSpec(b.shape, lambda i: (0, 0)))

    out_shape = [jax.ShapeDtypeStruct((b_pad, out_pad), jnp.float32)]
    out_specs = [pl.BlockSpec((tm, out_pad), lambda i: (i, 0))]
    if emit_hidden:
        out_shape.append(jax.ShapeDtypeStruct((b_pad, hid_pad), jnp.float32))
        out_specs.append(pl.BlockSpec((tm, hid_pad), lambda i: (i, 0)))

    kernel = functools.partial(
        _fused_mlp_kernel,
        num_layers=num_layers,
        emit_hidden=emit_hidden,
        approximate_gelu=approximate_gelu,
        compute_dtype=compute_dtype,
    )

    results = pl.pallas_call(
        kernel,
        out_shape=tuple(out_shape),
        grid_spec=pltpu.PrefetchScalarGridSpec(
            num_scalar_prefetch=0,
            grid=(b_pad // tm,),
            in_specs=in_specs,
            out_specs=tuple(out_specs),
        ),
        compiler_params=pltpu.CompilerParams(
            dimension_semantics=("parallel",),   # batch tiles shard across v7x's 2 TCs
            vmem_limit_bytes=vmem_limit,
        ),
    )(x_c, *ws, *bs)

    out = results[0][:batch, :d_out]
    if return_last_hidden:
        last_hidden = results[1][:batch, :d_hid] if emit_hidden else None
        return out, last_hidden
    return out


def _ref_forward(x, params, compute_dtype=jnp.float32):
    """Pure-JAX reference of the same math (PyTorch-layout weights). With
    compute_dtype=bf16 it mimics the kernel's bf16-input / f32-accumulate matmuls."""
    h = x.astype(compute_dtype)
    out = None
    last_hidden = None
    for i, (w, b) in enumerate(params):
        y = jnp.dot(h, jnp.transpose(w).astype(compute_dtype),
                    preferred_element_type=jnp.float32) + b
        if i < len(params) - 1:
            y = 0.5 * y * (1.0 + lax.erf(y * _INV_SQRT2))
            last_hidden = y
            h = y.astype(compute_dtype)
        else:
            out = y
    return out, last_hidden


if __name__ == "__main__":
    # layers = [input_dim, hidden..., output_dim] (heterogeneous widths)
    layer_sizes = (32, 96, 64, 16)
    batch = 8

    key = jax.random.PRNGKey(0)
    key, kx = jax.random.split(key)
    x = jax.random.normal(kx, (batch, layer_sizes[0]), jnp.float32)
    params = init_flexible_mlp_params(key, layer_sizes, scale=1.0, bias_scale=0.5)

    # ---- fp32 path: matches the exact-erf torch reference tightly ----
    packed_f32 = pack_mlp_params(params, layer_sizes, compute_dtype=jnp.float32)
    fwd_f32 = jax.jit(functools.partial(
        flexible_mlp_forward, layer_sizes=layer_sizes, return_last_hidden=True))
    out32, hid32 = fwd_f32(x, packed_f32)
    jax.block_until_ready(out32)
    jax.block_until_ready(hid32)

    ref32, ref_hid32 = _ref_forward(x, params, compute_dtype=jnp.float32)
    assert out32.shape == (batch, layer_sizes[-1])
    assert hid32.shape == (batch, layer_sizes[-2])
    assert jnp.allclose(out32, ref32, atol=1e-4, rtol=1e-4)
    assert jnp.allclose(hid32, ref_hid32, atol=1e-4, rtol=1e-4)

    # ---- bf16 path (default): bf16 MXU inputs, f32 accumulation / bias / GELU ----
    packed_bf16 = pack_mlp_params(params, layer_sizes)   # bf16 default
    fwd_bf16 = jax.jit(functools.partial(
        flexible_mlp_forward, layer_sizes=layer_sizes, return_last_hidden=True))
    out16, hid16 = fwd_bf16(x, packed_bf16)
    jax.block_until_ready(out16)
    jax.block_until_ready(hid16)

    ref16, ref_hid16 = _ref_forward(x, params, compute_dtype=jnp.bfloat16)
    assert jnp.allclose(out16, ref16, atol=1e-2, rtol=1e-2)
    assert jnp.allclose(hid16, ref_hid16, atol=1e-2, rtol=1e-2)

    # forward without the aux output (exercises the single-output kernel variant)
    fwd_plain = jax.jit(functools.partial(flexible_mlp_forward, layer_sizes=layer_sizes))
    out_only = fwd_plain(x, packed_bf16)
    jax.block_until_ready(out_only)
    assert jnp.allclose(out_only, out16, atol=1e-6, rtol=1e-6)

    print("KERNEL_OK")
</pallas_src>

<mosaic_0001>
module attributes {stable_mosaic.version = 11 : i64} {
  func.func @_fused_mlp_kernel(%arg0: i32, %arg1: memref<8x128xf32, #tpu.memory_space<vmem>>, %arg2: memref<128x128xf32, #tpu.memory_space<vmem>>, %arg3: memref<128x128xf32, #tpu.memory_space<vmem>>, %arg4: memref<128x128xf32, #tpu.memory_space<vmem>>, %arg5: memref<1x128xf32, #tpu.memory_space<vmem>>, %arg6: memref<1x128xf32, #tpu.memory_space<vmem>>, %arg7: memref<1x128xf32, #tpu.memory_space<vmem>>, %arg8: memref<8x128xf32, #tpu.memory_space<vmem>>, %arg9: memref<8x128xf32, #tpu.memory_space<vmem>>) attributes {dimension_semantics = [#tpu.dimension_semantics<parallel>], iteration_bounds = array<i64: 1>, scalar_prefetch = 0 : i64, scratch_operands = 0 : i64, tpu.core_type = #tpu.core_type<tc>, window_params = [{transform_indices = @transform_0, window_bounds = array<i64: 8, 128>}, {pipeline_mode = #tpu.pipeline_mode<synchronous>, transform_indices = @transform_1, window_bounds = array<i64: 128, 128>}, {pipeline_mode = #tpu.pipeline_mode<synchronous>, transform_indices = @transform_2, window_bounds = array<i64: 128, 128>}, {pipeline_mode = #tpu.pipeline_mode<synchronous>, transform_indices = @transform_3, window_bounds = array<i64: 128, 128>}, {pipeline_mode = #tpu.pipeline_mode<synchronous>, transform_indices = @transform_4, window_bounds = array<i64: 1, 128>}, {pipeline_mode = #tpu.pipeline_mode<synchronous>, transform_indices = @transform_5, window_bounds = array<i64: 1, 128>}, {pipeline_mode = #tpu.pipeline_mode<synchronous>, transform_indices = @transform_6, window_bounds = array<i64: 1, 128>}, {transform_indices = @transform_7, window_bounds = array<i64: 8, 128>}, {transform_indices = @transform_8, window_bounds = array<i64: 8, 128>}]} {
    %c0 = arith.constant 0 : index
    %c0_0 = arith.constant 0 : index
    %0 = vector.load %arg1[%c0, %c0_0] : memref<8x128xf32, #tpu.memory_space<vmem>>, vector<8x128xf32>
    %c0_1 = arith.constant 0 : index
    %c0_2 = arith.constant 0 : index
    %1 = vector.load %arg2[%c0_1, %c0_2] : memref<128x128xf32, #tpu.memory_space<vmem>>, vector<128x128xf32>
    %cst = arith.constant dense<0.000000e+00> : vector<8x128xf32>
    %2 = tpu.matmul %0, %1, %cst {dimension_numbers = #tpu.dot_dimension_numbers<[1], [0], [0], [1], [0, 0, 1, 1], [], []>} : vector<8x128xf32>, vector<128x128xf32>, vector<8x128xf32> -> vector<8x128xf32>
    %c0_3 = arith.constant 0 : index
    %c0_4 = arith.constant 0 : index
    %3 = vector.load %arg5[%c0_3, %c0_4] : memref<1x128xf32, #tpu.memory_space<vmem>>, vector<1x128xf32>
    %4 = vector.broadcast %3 : vector<1x128xf32> to vector<8x128xf32>
    %5 = arith.addf %2, %4 : vector<8x128xf32>
    %cst_5 = arith.constant 5.000000e-01 : f32
    %6 = vector.broadcast %cst_5 : f32 to vector<8x128xf32>
    %7 = arith.mulf %6, %5 : vector<8x128xf32>
    %cst_6 = arith.constant 0.707106769 : f32
    %8 = vector.broadcast %cst_6 : f32 to vector<8x128xf32>
    %9 = arith.mulf %5, %8 : vector<8x128xf32>
    %10 = math.erf %9 : vector<8x128xf32>
    %cst_7 = arith.constant 1.000000e+00 : f32
    %11 = vector.broadcast %cst_7 : f32 to vector<8x128xf32>
    %12 = arith.addf %11, %10 : vector<8x128xf32>
    %13 = arith.mulf %7, %12 : vector<8x128xf32>
    %c0_8 = arith.constant 0 : index
    %c0_9 = arith.constant 0 : index
    %14 = vector.load %arg3[%c0_8, %c0_9] : memref<128x128xf32, #tpu.memory_space<vmem>>, vector<128x128xf32>
    %cst_10 = arith.constant dense<0.000000e+00> : vector<8x128xf32>
    %15 = tpu.matmul %13, %14, %cst_10 {dimension_numbers = #tpu.dot_dimension_numbers<[1], [0], [0], [1], [0, 0, 1, 1], [], []>} : vector<8x128xf32>, vector<128x128xf32>, vector<8x128xf32> -> vector<8x128xf32>
    %c0_11 = arith.constant 0 : index
    %c0_12 = arith.constant 0 : index
    %16 = vector.load %arg6[%c0_11, %c0_12] : memref<1x128xf32, #tpu.memory_space<vmem>>, vector<1x128xf32>
    %17 = vector.broadcast %16 : vector<1x128xf32> to vector<8x128xf32>
    %18 = arith.addf %15, %17 : vector<8x128xf32>
    %cst_13 = arith.constant 5.000000e-01 : f32
    %19 = vector.broadcast %cst_13 : f32 to vector<8x128xf32>
    %20 = arith.mulf %19, %18 : vector<8x128xf32>
    %cst_14 = arith.constant 0.707106769 : f32
    %21 = vector.broadcast %cst_14 : f32 to vector<8x128xf32>
    %22 = arith.mulf %18, %21 : vector<8x128xf32>
    %23 = math.erf %22 : vector<8x128xf32>
    %cst_15 = arith.constant 1.000000e+00 : f32
    %24 = vector.broadcast %cst_15 : f32 to vector<8x128xf32>
    %25 = arith.addf %24, %23 : vector<8x128xf32>
    %26 = arith.mulf %20, %25 : vector<8x128xf32>
    %c0_16 = arith.constant 0 : index
    %c0_17 = arith.constant 0 : index
    %27 = vector.load %arg9[%c0_16, %c0_17] : memref<8x128xf32, #tpu.memory_space<vmem>>, vector<8x128xf32>
    tpu.vector_store %arg9[%c0_16, %c0_17], %26 {strides = array<i32>} : memref<8x128xf32, #tpu.memory_space<vmem>>, vector<8x128xf32>,
    %c0_18 = arith.constant 0 : index
    %c0_19 = arith.constant 0 : index
    %28 = vector.load %arg4[%c0_18, %c0_19] : memref<128x128xf32, #tpu.memory_space<vmem>>, vector<128x128xf32>
    %cst_20 = arith.constant dense<0.000000e+00> : vector<8x128xf32>
    %29 = tpu.matmul %26, %28, %cst_20 {dimension_numbers = #tpu.dot_dimension_numbers<[1], [0], [0], [1], [0, 0, 1, 1], [], []>} : vector<8x128xf32>, vector<128x128xf32>, vector<8x128xf32> -> vector<8x128xf32>
    %c0_21 = arith.constant 0 : index
    %c0_22 = arith.constant 0 : index
    %30 = vector.load %arg7[%c0_21, %c0_22] : memref<1x128xf32, #tpu.memory_space<vmem>>, vector<1x128xf32>
    %31 = vector.broadcast %30 : vector<1x128xf32> to vector<8x128xf32>
    %32 = arith.addf %29, %31 : vector<8x128xf32>
    %c0_23 = arith.constant 0 : index
    %c0_24 = arith.constant 0 : index
    %33 = vector.load %arg8[%c0_23, %c0_24] : memref<8x128xf32, #tpu.memory_space<vmem>>, vector<8x128xf32>
    tpu.vector_store %arg8[%c0_23, %c0_24], %32 {strides = array<i32>} : memref<8x128xf32, #tpu.memory_space<vmem>>, vector<8x128xf32>,
    return
  }
  func.func @transform_0(%arg0: i32) -> (i32, i32) {
    %c0_i32 = arith.constant 0 : i32
    %c0_i32_0 = arith.constant 0 : i32
    return %arg0, %c0_i32 : i32, i32
  }
  func.func @transform_1(%arg0: i32) -> (i32, i32) {
    %c0_i32 = arith.constant 0 : i32
    %c0_i32_0 = arith.constant 0 : i32
    %c0_i32_1 = arith.constant 0 : i32
    return %c0_i32, %c0_i32_0 : i32, i32
  }
  func.func @transform_2(%arg0: i32) -> (i32, i32) {
    %c0_i32 = arith.constant 0 : i32
    %c0_i32_0 = arith.constant 0 : i32
    %c0_i32_1 = arith.constant 0 : i32
    return %c0_i32, %c0_i32_0 : i32, i32
  }
  func.func @transform_3(%arg0: i32) -> (i32, i32) {
    %c0_i32 = arith.constant 0 : i32
    %c0_i32_0 = arith.constant 0 : i32
    %c0_i32_1 = arith.constant 0 : i32
    return %c0_i32, %c0_i32_0 : i32, i32
  }
  func.func @transform_4(%arg0: i32) -> (i32, i32) {
    %c0_i32 = arith.constant 0 : i32
    %c0_i32_0 = arith.constant 0 : i32
    %c0_i32_1 = arith.constant 0 : i32
    return %c0_i32, %c0_i32_0 : i32, i32
  }
  func.func @transform_5(%arg0: i32) -> (i32, i32) {
    %c0_i32 = arith.constant 0 : i32
    %c0_i32_0 = arith.constant 0 : i32
    %c0_i32_1 = arith.constant 0 : i32
    return %c0_i32, %c0_i32_0 : i32, i32
  }
  func.func @transform_6(%arg0: i32) -> (i32, i32) {
    %c0_i32 = arith.constant 0 : i32
    %c0_i32_0 = arith.constant 0 : i32
    %c0_i32_1 = arith.constant 0 : i32
    return %c0_i32, %c0_i32_0 : i32, i32
  }
  func.func @transform_7(%arg0: i32) -> (i32, i32) {
    %c0_i32 = arith.constant 0 : i32
    %c0_i32_0 = arith.constant 0 : i32
    return %arg0, %c0_i32 : i32, i32
  }
  func.func @transform_8(%arg0: i32) -> (i32, i32) {
    %c0_i32 = arith.constant 0 : i32
    %c0_i32_0 = arith.constant 0 : i32
    return %arg0, %c0_i32 : i32, i32
  }
}

</mosaic_0001>

<llo_original>
// kernel: flexible_mlp_forward.1
$region0: #{flexible_mlp_forward.1}
  #allocation0 [shape = 'u32[]', space=smem, size = 0x4, offset = 0x4, fixed_abs, tag = 'smem constant byte address 0x4 - core index']
  #allocation1 [shape = 'u32[144,128]{1,0:T(1,128)}', space=vmem, size = 0x12000, scoped, tag = 'internal scratch']
  %s0 = inlined_call_operand.vmem [shape: f32[8,128], index: 0, kind: input, shape index: {}]
  %s1 = inlined_call_operand.hbm [shape: f32[128,128], index: 1, kind: input, shape index: {}]
  %s2 = inlined_call_operand.hbm [shape: f32[128,128], index: 2, kind: input, shape index: {}]
  %s3 = inlined_call_operand.hbm [shape: f32[128,128], index: 3, kind: input, shape index: {}]
  %s4 = inlined_call_operand.vmem [shape: f32[1,128], index: 4, kind: input, shape index: {}]
  %s5 = inlined_call_operand.vmem [shape: f32[1,128], index: 5, kind: input, shape index: {}]
  %s6 = inlined_call_operand.vmem [shape: f32[1,128], index: 6, kind: input, shape index: {}]
  %s7 = inlined_call_operand.hbm [shape: f32[8,128], index: 7, kind: output, shape index: {0}]
  %s8 = inlined_call_operand.hbm [shape: f32[8,128], index: 8, kind: output, shape index: {1}]
  %9 = xla_tuple %s7, %s8
  %s10 = sld [smem:[#allocation0]]
  $region58: #{flexible_mlp_forward.1} parent=0
    _
  %s12 = ssub.s32 1, %s10
  %s13 = scalar_select 0, %s12, %s10
  $region1: #{flexible_mlp_forward.1} parent=0
    #allocation2 [shape = 'u8[65536]{0}', space=vmem, size = 0x10000, scoped, tag = 'input window, operand 1, single buffered']
    #allocation3 [shape = 's32[1]{0}', space=sflag, size = 0x4, scoped, tag = 'scoped memory for flexible_mlp_forward.1']
    #allocation4 [shape = 's32[1]{0}', space=sflag, size = 0x4, scoped, tag = 'scoped memory for flexible_mlp_forward.1']
    #allocation5 [shape = 'u8[65536]{0}', space=vmem, size = 0x10000, scoped, tag = 'input window, operand 2, single buffered']
    #allocation6 [shape = 's32[1]{0}', space=sflag, size = 0x4, scoped, tag = 'scoped memory for flexible_mlp_forward.1']
    #allocation7 [shape = 'u8[65536]{0}', space=vmem, size = 0x10000, scoped, tag = 'input window, operand 3, single buffered']
    #allocation8 [shape = 'u8[4096]{0}', space=vmem, size = 0x1000, scoped, tag = 'output window, operand 0, single buffered']
    #allocation9 [shape = 'u8[4096]{0}', space=vmem, size = 0x1000, scoped, tag = 'output window, operand 1, single buffered']
    #allocation10 [shape = 's32[1]{0}', space=sflag, size = 0x4, scoped, tag = 'scoped memory for flexible_mlp_forward.1']
    %14 = vsyncpa [#allocation3], 0
    %15 = vsyncpa [#allocation6], 0
    %16 = vsyncpa [#allocation4], 0
    %17 = vsyncpa [#allocation10], 0
    // Predicated region
    $region2: #{flexible_mlp_forward.1} parent=1 // pred_check
      _
    $region3: #{flexible_mlp_forward.1} parent=1 // pred_check_branch
      %19 = sbr.rel (0) target = $region5
    $region4: #{flexible_mlp_forward.1} parent=1 // pred_region
      _
    $region5: #{flexible_mlp_forward.1} parent=1 // pred_fallthru
      _
    // Predicated region
    $region6: #{flexible_mlp_forward.1} parent=1 // pred_check
      _
    $region7: #{flexible_mlp_forward.1} parent=1 // pred_check_branch
      %21 = sbr.rel (0) target = $region9
    $region8: #{flexible_mlp_forward.1} parent=1 // pred_region
      %s23 = ssub.s32 2048, 2048
      %24 = vsyncadd [#allocation3], %s23
      %s25 = sshll.u32 [#allocation2], 4
      %s26 = int_to_ptr.vmem [resolvable:$true] %s25
      %31 = dma.hbm_to_vmem [thread:$0]  %s1, 2048, %s26, [#allocation3], 128, 128, 8
    $region9: #{flexible_mlp_forward.1} parent=1 // pred_fallthru
      _
    // Predicated region
    $region10: #{flexible_mlp_forward.1} parent=1 // pred_check
      _
    $region11: #{flexible_mlp_forward.1} parent=1 // pred_check_branch
      %33 = sbr.rel (0) target = $region13
    $region12: #{flexible_mlp_forward.1} parent=1 // pred_region
      %s35 = ssub.s32 2048, 2048
      %36 = vsyncadd [#allocation6], %s35
      %s37 = sshll.u32 [#allocation5], 4
      %s38 = int_to_ptr.vmem [resolvable:$true] %s37
      %43 = dma.hbm_to_vmem [thread:$0]  %s2, 2048, %s38, [#allocation6], 128, 128, 8
    $region13: #{flexible_mlp_forward.1} parent=1 // pred_fallthru
      _
    // Predicated region
    $region14: #{flexible_mlp_forward.1} parent=1 // pred_check
      _
    $region15: #{flexible_mlp_forward.1} parent=1 // pred_check_branch
      %45 = sbr.rel (0) target = $region17
    $region16: #{flexible_mlp_forward.1} parent=1 // pred_region
      %s47 = ssub.s32 2048, 2048
      %48 = vsyncadd [#allocation6], %s47
      %s49 = sshll.u32 [#allocation7], 4
      %s50 = int_to_ptr.vmem [resolvable:$true] %s49
      %55 = dma.hbm_to_vmem [thread:$0]  %s3, 2048, %s50, [#allocation6], 128, 128, 8
    $region17: #{flexible_mlp_forward.1} parent=1 // pred_fallthru
      _
    // Predicated region
    $region18: #{flexible_mlp_forward.1} parent=1 // pred_check
      _
    $region19: #{flexible_mlp_forward.1} parent=1 // pred_check_branch
      %57 = sbr.rel (0) target = $region21
    $region20: #{flexible_mlp_forward.1} parent=1 // pred_region
      _
    $region21: #{flexible_mlp_forward.1} parent=1 // pred_fallthru
      _
    // Predicated region
    $region22: #{flexible_mlp_forward.1} parent=1 // pred_check
      _
    $region23: #{flexible_mlp_forward.1} parent=1 // pred_check_branch
      %59 = sbr.rel (0) target = $region25
    $region24: #{flexible_mlp_forward.1} parent=1 // pred_region
      _
    $region25: #{flexible_mlp_forward.1} parent=1 // pred_fallthru
      _
    // Predicated region
    $region26: #{flexible_mlp_forward.1} parent=1 // pred_check
      _
    $region27: #{flexible_mlp_forward.1} parent=1 // pred_check_branch
      %61 = sbr.rel (0) target = $region29
    $region28: #{flexible_mlp_forward.1} parent=1 // pred_region
      _
    $region29: #{flexible_mlp_forward.1} parent=1 // pred_fallthru
      _
    // Predicated region
    $region30: #{flexible_mlp_forward.1} parent=1 // pred_check
      _
    $region31: #{flexible_mlp_forward.1} parent=1 // pred_check_branch
      %63 = sbr.rel (0) target = $region33
    $region32: #{flexible_mlp_forward.1} parent=1 // pred_region
      %64 = dma.done [#allocation3], 2048
    $region33: #{flexible_mlp_forward.1} parent=1 // pred_fallthru
      _
    // Predicated region
    $region34: #{flexible_mlp_forward.1} parent=1 // pred_check
      _
    $region35: #{flexible_mlp_forward.1} parent=1 // pred_check_branch
      %66 = sbr.rel (0) target = $region37
    $region36: #{flexible_mlp_forward.1} parent=1 // pred_region
      %67 = dma.done [#allocation6], 2048
    $region37: #{flexible_mlp_forward.1} parent=1 // pred_fallthru
      _
    // Predicated region
    $region38: #{flexible_mlp_forward.1} parent=1 // pred_check
      _
    $region39: #{flexible_mlp_forward.1} parent=1 // pred_check_branch
      %69 = sbr.rel (0) target = $region41
    $region40: #{flexible_mlp_forward.1} parent=1 // pred_region
      %70 = dma.done [#allocation6], 2048
    $region41: #{flexible_mlp_forward.1} parent=1 // pred_fallthru
      _
    %v71 = vld [vmem:[%s0] sm:$0xff]
    %v72 = vld [vmem:[#allocation2] sm:$0xff]
    %v73 = vld [vmem:[#allocation2 + $0x8] sm:$0xff]
    %v74 = vld [vmem:[#allocation2 + $0x10] sm:$0xff]
    %v75 = vld [vmem:[#allocation2 + $0x18] sm:$0xff]
    %v76 = vld [vmem:[#allocation2 + $0x20] sm:$0xff]
    %v77 = vld [vmem:[#allocation2 + $0x28] sm:$0xff]
    %v78 = vld [vmem:[#allocation2 + $0x30] sm:$0xff]
    %v79 = vld [vmem:[#allocation2 + $0x38] sm:$0xff]
    %v80 = vld [vmem:[#allocation2 + $0x40] sm:$0xff]
    %v81 = vld [vmem:[#allocation2 + $0x48] sm:$0xff]
    %v82 = vld [vmem:[#allocation2 + $0x50] sm:$0xff]
    %v83 = vld [vmem:[#allocation2 + $0x58] sm:$0xff]
    %v84 = vld [vmem:[#allocation2 + $0x60] sm:$0xff]
    %v85 = vld [vmem:[#allocation2 + $0x68] sm:$0xff]
    %v86 = vld [vmem:[#allocation2 + $0x70] sm:$0xff]
    %v87 = vld [vmem:[#allocation2 + $0x78] sm:$0xff]
    %v88 = vld [vmem:[%s4] sm:$0x1]
    %v90 = vlaneseq
    %v91 = vshrl.u32 %v90, 7
    %v92 = vsub.s32 0, %v91
    %v93 = vrot.slane %v88, %v92
    %95 = vmatprep.subr.mxu0 0.0
    %96 = vmatpush1.msra.mxu0 %v72
    %97 = vmatprep.subr.mxu0 0.0
    %98 = vmatpush1.msra.mxu0 %v73
    %99 = vmatprep.subr.mxu0 0.0
    %100 = vmatpush1.msra.mxu0 %v74
    %101 = vmatprep.subr.mxu0 0.0
    %102 = vmatpush1.msra.mxu0 %v75
    %103 = vmatprep.subr.mxu0 0.0
    %104 = vmatpush1.msra.mxu0 %v76
    %105 = vmatprep.subr.mxu0 0.0
    %106 = vmatpush1.msra.mxu0 %v77
    %107 = vmatprep.subr.mxu0 0.0
    %108 = vmatpush1.msra.mxu0 %v78
    %109 = vmatprep.subr.mxu0 0.0
    %110 = vmatpush1.msra.mxu0 %v79
    %111 = vmatprep.subr.mxu0 0.0
    %112 = vmatpush1.msra.mxu0 %v80
    %113 = vmatprep.subr.mxu0 0.0
    %114 = vmatpush1.msra.mxu0 %v81
    %115 = vmatprep.subr.mxu0 0.0
    %116 = vmatpush1.msra.mxu0 %v82
    %117 = vmatprep.subr.mxu0 0.0
    %118 = vmatpush1.msra.mxu0 %v83
    %119 = vmatprep.subr.mxu0 0.0
    %120 = vmatpush1.msra.mxu0 %v84
    %121 = vmatprep.subr.mxu0 0.0
    %122 = vmatpush1.msra.mxu0 %v85
    %123 = vmatprep.subr.mxu0 0.0
    %124 = vmatpush1.msra.mxu0 %v86
    %125 = vmatprep.subr.mxu0 0.0
    %126 = vmatpush1.msra.mxu0 %v87
    %127 = vmatprep.subr.mxu0 0.0
    %128 = vmatpush1.msra.mxu0 0.0
    %129 = vmatprep.subr.mxu0 0.0
    %130 = vmatpush1.msra.mxu0 0.0
    %131 = vmatprep.subr.mxu0 0.0
    %132 = vmatpush1.msra.mxu0 0.0
    %133 = vmatprep.subr.mxu0 0.0
    %134 = vmatpush1.msra.mxu0 0.0
    %135 = vmatprep.subr.mxu0 0.0
    %136 = vmatpush1.msra.mxu0 0.0
    %137 = vmatprep.subr.mxu0 0.0
    %138 = vmatpush1.msra.mxu0 0.0
    %139 = vmatprep.subr.mxu0 0.0
    %140 = vmatpush1.msra.mxu0 0.0
    %141 = vmatprep.subr.mxu0 0.0
    %142 = vmatpush1.msra.mxu0 0.0
    %143 = vmatprep.subr.mxu0 0.0
    %144 = vmatpush1.msra.mxu0 0.0
    %145 = vmatprep.subr.mxu0 0.0
    %146 = vmatpush1.msra.mxu0 0.0
    %147 = vmatprep.subr.mxu0 0.0
    %148 = vmatpush1.msra.mxu0 0.0
    %149 = vmatprep.subr.mxu0 0.0
    %150 = vmatpush1.msra.mxu0 0.0
    %151 = vmatprep.subr.mxu0 0.0
    %152 = vmatpush1.msra.mxu0 0.0
    %153 = vmatprep.subr.mxu0 0.0
    %154 = vmatpush1.msra.mxu0 0.0
    %155 = vmatprep.subr.mxu0 0.0
    %156 = vmatpush1.msra.mxu0 0.0
    %157 = vmatprep.subr.mxu0 0.0
    %158 = vmatpush1.msra.mxu0 0.0
    %159 = vmatprep.mubr.f32.mxu0 0.0
    %160 = vmatmul.mubr.f32.gmra.mrb[0].mxu0 %v71
    %v161 = vpop.f32.mrb[0].mxu0
    %v162 = vadd.f32 %v93, %v161
    %v163 = vpop.f32.mrb[0].mxu0
    %164 = vdwg.mxu0
    %v165 = vmul.f32 %v162, 0.5
    %v166 = vmul.f32 %v162, 0.70710677
    %v167 = verf.f32.pop %v166
    %v168 = vadd.f32 %v167, 1.0
    %v169 = vmul.f32 %v165, %v168
    %v170 = vld [vmem:[#allocation5] sm:$0xff]
    %v171 = vld [vmem:[#allocation5 + $0x8] sm:$0xff]
    %v172 = vld [vmem:[#allocation5 + $0x10] sm:$0xff]
    %v173 = vld [vmem:[#allocation5 + $0x18] sm:$0xff]
    %v174 = vld [vmem:[#allocation5 + $0x20] sm:$0xff]
    %v175 = vld [vmem:[#allocation5 + $0x28] sm:$0xff]
    %v176 = vld [vmem:[#allocation5 + $0x30] sm:$0xff]
    %v177 = vld [vmem:[#allocation5 + $0x38] sm:$0xff]
    %v178 = vld [vmem:[#allocation5 + $0x40] sm:$0xff]
    %v179 = vld [vmem:[#allocation5 + $0x48] sm:$0xff]
    %v180 = vld [vmem:[#allocation5 + $0x50] sm:$0xff]
    %v181 = vld [vmem:[#allocation5 + $0x58] sm:$0xff]
    %v182 = vld [vmem:[#allocation5 + $0x60] sm:$0xff]
    %v183 = vld [vmem:[#allocation5 + $0x68] sm:$0xff]
    %v184 = vld [vmem:[#allocation5 + $0x70] sm:$0xff]
    %v185 = vld [vmem:[#allocation5 + $0x78] sm:$0xff]
    %v186 = vld [vmem:[%s5] sm:$0x1]
    %v188 = vlaneseq
    %v189 = vshrl.u32 %v188, 7
    %v190 = vsub.s32 0, %v189
    %v191 = vrot.slane %v186, %v190
    %193 = vmatprep.subr.mxu0 0.0
    %194 = vmatpush1.msra.mxu0 %v170
    %195 = vmatprep.subr.mxu0 0.0
    %196 = vmatpush1.msra.mxu0 %v171
    %197 = vmatprep.subr.mxu0 0.0
    %198 = vmatpush1.msra.mxu0 %v172
    %199 = vmatprep.subr.mxu0 0.0
    %200 = vmatpush1.msra.mxu0 %v173
    %201 = vmatprep.subr.mxu0 0.0
    %202 = vmatpush1.msra.mxu0 %v174
    %203 = vmatprep.subr.mxu0 0.0
    %204 = vmatpush1.msra.mxu0 %v175
    %205 = vmatprep.subr.mxu0 0.0
    %206 = vmatpush1.msra.mxu0 %v176
    %207 = vmatprep.subr.mxu0 0.0
    %208 = vmatpush1.msra.mxu0 %v177
    %209 = vmatprep.subr.mxu0 0.0
    %210 = vmatpush1.msra.mxu0 %v178
    %211 = vmatprep.subr.mxu0 0.0
    %212 = vmatpush1.msra.mxu0 %v179
    %213 = vmatprep.subr.mxu0 0.0
    %214 = vmatpush1.msra.mxu0 %v180
    %215 = vmatprep.subr.mxu0 0.0
    %216 = vmatpush1.msra.mxu0 %v181
    %217 = vmatprep.subr.mxu0 0.0
    %218 = vmatpush1.msra.mxu0 %v182
    %219 = vmatprep.subr.mxu0 0.0
    %220 = vmatpush1.msra.mxu0 %v183
    %221 = vmatprep.subr.mxu0 0.0
    %222 = vmatpush1.msra.mxu0 %v184
    %223 = vmatprep.subr.mxu0 0.0
    %224 = vmatpush1.msra.mxu0 %v185
    %225 = vmatprep.subr.mxu0 0.0
    %226 = vmatpush1.msra.mxu0 0.0
    %227 = vmatprep.subr.mxu0 0.0
    %228 = vmatpush1.msra.mxu0 0.0
    %229 = vmatprep.subr.mxu0 0.0
    %230 = vmatpush1.msra.mxu0 0.0
    %231 = vmatprep.subr.mxu0 0.0
    %232 = vmatpush1.msra.mxu0 0.0
    %233 = vmatprep.subr.mxu0 0.0
    %234 = vmatpush1.msra.mxu0 0.0
    %235 = vmatprep.subr.mxu0 0.0
    %236 = vmatpush1.msra.mxu0 0.0
    %237 = vmatprep.subr.mxu0 0.0
    %238 = vmatpush1.msra.mxu0 0.0
    %239 = vmatprep.subr.mxu0 0.0
    %240 = vmatpush1.msra.mxu0 0.0
    %241 = vmatprep.subr.mxu0 0.0
    %242 = vmatpush1.msra.mxu0 0.0
    %243 = vmatprep.subr.mxu0 0.0
    %244 = vmatpush1.msra.mxu0 0.0
    %245 = vmatprep.subr.mxu0 0.0
    %246 = vmatpush1.msra.mxu0 0.0
    %247 = vmatprep.subr.mxu0 0.0
    %248 = vmatpush1.msra.mxu0 0.0
    %249 = vmatprep.subr.mxu0 0.0
    %250 = vmatpush1.msra.mxu0 0.0
    %251 = vmatprep.subr.mxu0 0.0
    %252 = vmatpush1.msra.mxu0 0.0
    %253 = vmatprep.subr.mxu0 0.0
    %254 = vmatpush1.msra.mxu0 0.0
    %255 = vmatprep.subr.mxu0 0.0
    %256 = vmatpush1.msra.mxu0 0.0
    %257 = vmatprep.mubr.f32.mxu0 0.0
    %258 = vmatmul.mubr.f32.gmra.mrb[0].mxu0 %v169
    %v259 = vpop.f32.mrb[0].mxu0
    %v260 = vadd.f32 %v191, %v259
    %v261 = vpop.f32.mrb[0].mxu0
    %262 = vdwg.mxu0
    %v263 = vmul.f32 %v260, 0.5
    %v264 = vmul.f32 %v260, 0.70710677
    %v265 = verf.f32.pop %v264
    %v266 = vadd.f32 %v265, 1.0
    %v267 = vmul.f32 %v263, %v266
    %268 = vst [vmem:[#allocation9] sm:$0xff] %v267
    %v269 = vld [vmem:[#allocation7] sm:$0xff]
    %v270 = vld [vmem:[#allocation7 + $0x8] sm:$0xff]
    %v271 = vld [vmem:[#allocation7 + $0x10] sm:$0xff]
    %v272 = vld [vmem:[#allocation7 + $0x18] sm:$0xff]
    %v273 = vld [vmem:[#allocation7 + $0x20] sm:$0xff]
    %v274 = vld [vmem:[#allocation7 + $0x28] sm:$0xff]
    %v275 = vld [vmem:[#allocation7 + $0x30] sm:$0xff]
    %v276 = vld [vmem:[#allocation7 + $0x38] sm:$0xff]
    %v277 = vld [vmem:[#allocation7 + $0x40] sm:$0xff]
    %v278 = vld [vmem:[#allocation7 + $0x48] sm:$0xff]
    %v279 = vld [vmem:[#allocation7 + $0x50] sm:$0xff]
    %v280 = vld [vmem:[#allocation7 + $0x58] sm:$0xff]
    %v281 = vld [vmem:[#allocation7 + $0x60] sm:$0xff]
    %v282 = vld [vmem:[#allocation7 + $0x68] sm:$0xff]
    %v283 = vld [vmem:[#allocation7 + $0x70] sm:$0xff]
    %v284 = vld [vmem:[#allocation7 + $0x78] sm:$0xff]
    %v285 = vld [vmem:[%s6] sm:$0x1]
    %v287 = vlaneseq
    %v288 = vshrl.u32 %v287, 7
    %v289 = vsub.s32 0, %v288
    %v290 = vrot.slane %v285, %v289
    %292 = vmatprep.subr.mxu0 0.0
    %293 = vmatpush1.msra.mxu0 %v269
    %294 = vmatprep.subr.mxu0 0.0
    %295 = vmatpush1.msra.mxu0 %v270
    %296 = vmatprep.subr.mxu0 0.0
    %297 = vmatpush1.msra.mxu0 %v271
    %298 = vmatprep.subr.mxu0 0.0
    %299 = vmatpush1.msra.mxu0 %v272
    %300 = vmatprep.subr.mxu0 0.0
    %301 = vmatpush1.msra.mxu0 %v273
    %302 = vmatprep.subr.mxu0 0.0
    %303 = vmatpush1.msra.mxu0 %v274
    %304 = vmatprep.subr.mxu0 0.0
    %305 = vmatpush1.msra.mxu0 %v275
    %306 = vmatprep.subr.mxu0 0.0
    %307 = vmatpush1.msra.mxu0 %v276
    %308 = vmatprep.subr.mxu0 0.0
    %309 = vmatpush1.msra.mxu0 %v277
    %310 = vmatprep.subr.mxu0 0.0
    %311 = vmatpush1.msra.mxu0 %v278
    %312 = vmatprep.subr.mxu0 0.0
    %313 = vmatpush1.msra.mxu0 %v279
    %314 = vmatprep.subr.mxu0 0.0
    %315 = vmatpush1.msra.mxu0 %v280
    %316 = vmatprep.subr.mxu0 0.0
    %317 = vmatpush1.msra.mxu0 %v281
    %318 = vmatprep.subr.mxu0 0.0
    %319 = vmatpush1.msra.mxu0 %v282
    %320 = vmatprep.subr.mxu0 0.0
    %321 = vmatpush1.msra.mxu0 %v283
    %322 = vmatprep.subr.mxu0 0.0
    %323 = vmatpush1.msra.mxu0 %v284
    %324 = vmatprep.subr.mxu0 0.0
    %325 = vmatpush1.msra.mxu0 0.0
    %326 = vmatprep.subr.mxu0 0.0
    %327 = vmatpush1.msra.mxu0 0.0
    %328 = vmatprep.subr.mxu0 0.0
    %329 = vmatpush1.msra.mxu0 0.0
    %330 = vmatprep.subr.mxu0 0.0
    %331 = vmatpush1.msra.mxu0 0.0
    %332 = vmatprep.subr.mxu0 0.0
    %333 = vmatpush1.msra.mxu0 0.0
    %334 = vmatprep.subr.mxu0 0.0
    %335 = vmatpush1.msra.mxu0 0.0
    %336 = vmatprep.subr.mxu0 0.0
    %337 = vmatpush1.msra.mxu0 0.0
    %338 = vmatprep.subr.mxu0 0.0
    %339 = vmatpush1.msra.mxu0 0.0
    %340 = vmatprep.subr.mxu0 0.0
    %341 = vmatpush1.msra.mxu0 0.0
    %342 = vmatprep.subr.mxu0 0.0
    %343 = vmatpush1.msra.mxu0 0.0
    %344 = vmatprep.subr.mxu0 0.0
    %345 = vmatpush1.msra.mxu0 0.0
    %346 = vmatprep.subr.mxu0 0.0
    %347 = vmatpush1.msra.mxu0 0.0
    %348 = vmatprep.subr.mxu0 0.0
    %349 = vmatpush1.msra.mxu0 0.0
    %350 = vmatprep.subr.mxu0 0.0
    %351 = vmatpush1.msra.mxu0 0.0
    %352 = vmatprep.subr.mxu0 0.0
    %353 = vmatpush1.msra.mxu0 0.0
    %354 = vmatprep.subr.mxu0 0.0
    %355 = vmatpush1.msra.mxu0 0.0
    %356 = vmatprep.mubr.f32.mxu0 0.0
    %357 = vmatmul.mubr.f32.gmra.mrb[0].mxu0 %v267
    %v358 = vpop.f32.mrb[0].mxu0
    %v359 = vadd.f32 %v290, %v358
    %v360 = vpop.f32.mrb[0].mxu0
    %361 = vdwg.mxu0
    %362 = vst [vmem:[#allocation8] sm:$0xff] %v359
    // Predicated region
    $region42: #{flexible_mlp_forward.1} parent=1 // pred_check
      _
    $region43: #{flexible_mlp_forward.1} parent=1 // pred_check_branch
      %364 = sbr.rel (0) target = $region45
    $region44: #{flexible_mlp_forward.1} parent=1 // pred_region
      %s366 = ssub.s32 128, 128
      %367 = vsyncadd [#allocation4], %s366
      %s369 = sshll.u32 [#allocation8], 4
      %s370 = int_to_ptr.vmem [resolvable:$true] %s369
      %372 = dma.vmem_to_hbm [thread:$0]  %s370, 128, %s7, [#allocation4]
    $region45: #{flexible_mlp_forward.1} parent=1 // pred_fallthru
      _
    // Predicated region
    $region46: #{flexible_mlp_forward.1} parent=1 // pred_check
      _
    $region47: #{flexible_mlp_forward.1} parent=1 // pred_check_branch
      %374 = sbr.rel (0) target = $region49
    $region48: #{flexible_mlp_forward.1} parent=1 // pred_region
      %s376 = ssub.s32 128, 128
      %377 = vsyncadd [#allocation10], %s376
      %s379 = sshll.u32 [#allocation9], 4
      %s380 = int_to_ptr.vmem [resolvable:$true] %s379
      %382 = dma.vmem_to_hbm [thread:$0]  %s380, 128, %s8, [#allocation10]
    $region49: #{flexible_mlp_forward.1} parent=1 // pred_fallthru
      _
    // Predicated region
    $region50: #{flexible_mlp_forward.1} parent=1 // pred_check
      _
    $region51: #{flexible_mlp_forward.1} parent=1 // pred_check_branch
      %384 = sbr.rel (0) target = $region53
    $region52: #{flexible_mlp_forward.1} parent=1 // pred_region
      %385 = dma.done [#allocation4], 128
    $region53: #{flexible_mlp_forward.1} parent=1 // pred_fallthru
      _
    // Predicated region
    $region54: #{flexible_mlp_forward.1} parent=1 // pred_check
      _
    $region55: #{flexible_mlp_forward.1} parent=1 // pred_check_branch
      %387 = sbr.rel (0) target = $region57
    $region56: #{flexible_mlp_forward.1} parent=1 // pred_region
      %388 = dma.done [#allocation10], 128
    $region57: #{flexible_mlp_forward.1} parent=1 // pred_fallthru
      _
    %389 = vsyncpa [#allocation3], 1
    %390 = vsyncpa [#allocation6], 1
    %391 = vsyncpa [#allocation4], 1
    %392 = vsyncpa [#allocation10], 1

</llo_original>
